<compile_context>
chip_gen: v7x
topology: tpu7x:2x2x1
jax: 0.10.0
libtpu: 0.0.40
codegen_flags: <defaults>
</compile_context>

<pallas_src>
import functools

import jax
import jax.numpy as jnp
from jax.experimental import pallas as pl
from jax.experimental.pallas import tpu as pltpu

_SUBLANE = 8  # vreg sublane width: M tile must be a multiple of 8 (or cover M)


def _round_up(x, m):
    return (x + m - 1) // m * m


def _patch_proj_kernel(x_ref, w_ref, b_ref, o_ref):
    # x_ref: [tm, K] patch vectors, w_ref: [K, D], b_ref: [1, D] (f32),
    # o_ref: [tm, D].  f32 accumulation on the MXU regardless of operand dtype.
    acc = jnp.dot(x_ref[...], w_ref[...], preferred_element_type=jnp.float32)
    o_ref[...] = (acc + b_ref[...]).astype(o_ref.dtype)


def prepare_patch_proj_params(weight, bias, *, compute_dtype=None):
    """Conv params [D, C, ph, pw], [D] -> matmul params [K, D], [1, D] (f32).

    Hoisted out of the per-forward path: call once at parameter-prep time.
    K and D are intentionally left unpadded (see module docstring).
    """
    D = weight.shape[0]
    K = weight.shape[1] * weight.shape[2] * weight.shape[3]
    if compute_dtype is None:
        compute_dtype = weight.dtype
    w_mat = weight.reshape(D, K).T.astype(compute_dtype)
    b_mat = bias.astype(jnp.float32).reshape(1, D)
    return w_mat, b_mat


def patch_embed_apply(x, w_mat, b_mat, patch_size, *, out_dtype=None,
                      block_m=2048):
    """PatchEmbed forward from pre-prepared matmul params.

    Args:
      x:      [B, C, H, W] (NCHW, like PyTorch)
      w_mat:  [K, D] prepared projection weight (K = C*ph*pw)
      b_mat:  [1, D] prepared bias (f32)
      patch_size: (ph, pw)
      out_dtype: output dtype; defaults to x.dtype (module parity).  Pass
        jnp.bfloat16 if downstream tolerates it -- the output is the largest
        HBM stream, so halving it is a big win (esp. v5e, 1 vst slot/bundle).
      block_m: M-tile size; sweep 1024-4096 (larger on v7x, but keep the grid
        at >=2 steps for the megacore split and watch the 64 MiB VMEM only at
        ViT-scale K/D).
    Returns:
      [B, num_patches, D]
    """
    B, C, H, W = x.shape
    ph, pw = patch_size
    K, D = w_mat.shape
    assert H % ph == 0 and W % pw == 0, "image size must divide by patch size"
    assert K == C * ph * pw
    Hp, Wp = H // ph, W // pw
    num_patches = Hp * Wp
    M = B * num_patches
    out_dtype = x.dtype if out_dtype is None else out_dtype
    compute_dtype = w_mat.dtype

    # Extract & flatten non-overlapping patches -> (M, K) in (C, ph, pw) order
    # (same order as the PyTorch conv weight).  With allow_input_fusion below,
    # XLA may fuse this transpose/cast into the kernel input DMA instead of
    # materializing `patches` in HBM (one full read+write saved).
    patches = x.reshape(B, C, Hp, ph, Wp, pw)
    patches = jnp.transpose(patches, (0, 2, 4, 1, 3, 5)).reshape(M, K)
    patches = patches.astype(compute_dtype)

    # M tiling.  tm is a multiple of 8 (sublane) unless it covers all of M;
    # the last grid block may be ragged -- Pallas masks its OOB writes, so no
    # jnp.pad of the activations and no post-kernel slice are needed.
    tm = min(block_m, _round_up(M, _SUBLANE))
    grid = (pl.cdiv(M, tm),)

    # Per-step VMEM: ~2*tm*(K + D)*itemsize + K*D*itemsize -> a few MB at Swin
    # scale, well under the 32 MiB scoped default.  At ViT scale (K=768,
    # D=1024) drop block_m or raise vmem_limit_bytes.
    # TODO(synk): grid-invariant weight/bias could be single-buffered
    # (pipeline_mode=pl.Buffered(1)) to free VMEM headroom at ViT scale (v7x).
    itm_in = jnp.dtype(compute_dtype).itemsize
    itm_out = jnp.dtype(out_dtype).itemsize
    cost = pl.CostEstimate(
        flops=2 * M * K * D,
        transcendentals=0,
        bytes_accessed=(M * K * itm_in + K * D * itm_in + D * 4
                        + M * D * itm_out),
    )

    out = pl.pallas_call(
        _patch_proj_kernel,
        out_shape=jax.ShapeDtypeStruct((M, D), out_dtype),
        grid=grid,
        in_specs=[
            pl.BlockSpec((tm, K), lambda i: (i, 0)),    # patches: tiled on M
            pl.BlockSpec((K, D), lambda i: (0, 0)),     # weight: VMEM-resident
            pl.BlockSpec((1, D), lambda i: (0, 0)),     # bias:   VMEM-resident
        ],
        out_specs=pl.BlockSpec((tm, D), lambda i: (i, 0)),
        compiler_params=pltpu.CompilerParams(
            dimension_semantics=("parallel",),           # megacore-shard M
            allow_input_fusion=[True, False, False],     # fuse patch transpose
        ),
        cost_estimate=cost,
    )(patches, w_mat, b_mat)

    # [M, D] -> [B, num_patches, D]: contiguous split of the leading dim, pure
    # metadata, no slice/copy (matches PyTorch's x.flatten(2).transpose(1, 2)).
    return out.reshape(B, num_patches, D)


def patch_embed_forward(x, weight, bias, patch_size, *, compute_dtype=None,
                        out_dtype=None, block_m=2048):
    """Convenience wrapper taking raw PyTorch-layout conv params.

    compute_dtype defaults to x.dtype (f32 parity with nn.Conv2d); pass
    jnp.bfloat16 explicitly to trade precision for HBM bandwidth.  Hot-path
    callers should instead call prepare_patch_proj_params once and use
    patch_embed_apply.
    """
    if compute_dtype is None:
        compute_dtype = x.dtype
    w_mat, b_mat = prepare_patch_proj_params(
        weight, bias, compute_dtype=compute_dtype)
    return patch_embed_apply(x, w_mat, b_mat, patch_size,
                             out_dtype=out_dtype, block_m=block_m)


if __name__ == "__main__":
    # Small shapes consistent with the module: img_size=16, patch_size=4,
    # in_channels=4, embed_dim=32  ->  B=2, num_patches=16, K=64, M=32.
    B, C, H, W = 2, 4, 16, 16
    ph = pw = 4
    D = 32

    key = jax.random.PRNGKey(0)
    kx, kw, kb = jax.random.split(key, 3)
    x = jax.random.normal(kx, (B, C, H, W), dtype=jnp.float32)
    weight = jax.random.normal(kw, (D, C, ph, pw), dtype=jnp.float32) * 0.02
    bias = jax.random.normal(kb, (D,), dtype=jnp.float32) * 0.02

    # Prepare the projection params once (hoisted out of the forward path),
    # then run the jitted forward.
    w_mat, b_mat = prepare_patch_proj_params(weight, bias, compute_dtype=x.dtype)
    fwd = jax.jit(functools.partial(patch_embed_apply, patch_size=(ph, pw)))
    out = jax.block_until_ready(fwd(x, w_mat, b_mat))

    # Convenience (raw-param) path must agree.
    out2 = jax.block_until_ready(patch_embed_forward(x, weight, bias, (ph, pw)))

    # Reference: same semantics as the PyTorch module (Conv2d + flatten + transpose).
    ref = jax.lax.conv_general_dilated(
        x, weight, window_strides=(ph, pw), padding="VALID",
        dimension_numbers=("NCHW", "OIHW", "NCHW"),
    ) + bias.reshape(1, D, 1, 1)
    ref = ref.reshape(B, D, -1).transpose(0, 2, 1)  # flatten(2).transpose(1,2)

    assert out.shape == (B, (H // ph) * (W // pw), D)
    assert out.dtype == x.dtype
    # f32 operands with f32 accumulation; MXU may still round operands
    # internally at default precision, so keep a modest tolerance.
    assert jnp.allclose(out, ref, atol=2e-2, rtol=2e-2)
    assert jnp.allclose(out2, ref, atol=2e-2, rtol=2e-2)

    print("KERNEL_OK")
</pallas_src>

<mosaic_0001>
module attributes {stable_mosaic.version = 11 : i64} {
  func.func @_patch_proj_kernel(%arg0: i32, %arg1: memref<32x64xf32, #tpu.memory_space<vmem>>, %arg2: memref<64x32xf32, #tpu.memory_space<vmem>>, %arg3: memref<1x32xf32, #tpu.memory_space<vmem>>, %arg4: memref<32x32xf32, #tpu.memory_space<vmem>>) attributes {dimension_semantics = [#tpu.dimension_semantics<parallel>], iteration_bounds = array<i64: 1>, scalar_prefetch = 0 : i64, scratch_operands = 0 : i64, tpu.core_type = #tpu.core_type<tc>, window_params = [{transform_indices = @transform_0, window_bounds = array<i64: 32, 64>}, {pipeline_mode = #tpu.pipeline_mode<synchronous>, transform_indices = @transform_1, window_bounds = array<i64: 64, 32>}, {pipeline_mode = #tpu.pipeline_mode<synchronous>, transform_indices = @transform_2, window_bounds = array<i64: 1, 32>}, {transform_indices = @transform_3, window_bounds = array<i64: 32, 32>}]} {
    %c0 = arith.constant 0 : index
    %c0_0 = arith.constant 0 : index
    %0 = vector.load %arg1[%c0, %c0_0] : memref<32x64xf32, #tpu.memory_space<vmem>>, vector<32x64xf32>
    %c0_1 = arith.constant 0 : index
    %c0_2 = arith.constant 0 : index
    %1 = vector.load %arg2[%c0_1, %c0_2] : memref<64x32xf32, #tpu.memory_space<vmem>>, vector<64x32xf32>
    %cst = arith.constant dense<0.000000e+00> : vector<32x32xf32>
    %2 = tpu.matmul %0, %1, %cst {dimension_numbers = #tpu.dot_dimension_numbers<[1], [0], [0], [1], [0, 0, 1, 1], [], []>} : vector<32x64xf32>, vector<64x32xf32>, vector<32x32xf32> -> vector<32x32xf32>
    %c0_3 = arith.constant 0 : index
    %c0_4 = arith.constant 0 : index
    %3 = vector.load %arg3[%c0_3, %c0_4] : memref<1x32xf32, #tpu.memory_space<vmem>>, vector<1x32xf32>
    %4 = vector.broadcast %3 : vector<1x32xf32> to vector<32x32xf32>
    %5 = arith.addf %2, %4 : vector<32x32xf32>
    %c0_5 = arith.constant 0 : index
    %c0_6 = arith.constant 0 : index
    %6 = vector.load %arg4[%c0_5, %c0_6] : memref<32x32xf32, #tpu.memory_space<vmem>>, vector<32x32xf32>
    tpu.vector_store %arg4[%c0_5, %c0_6], %5 {strides = array<i32>} : memref<32x32xf32, #tpu.memory_space<vmem>>, vector<32x32xf32>,
    return
  }
  func.func @transform_0(%arg0: i32) -> (i32, i32) {
    %c0_i32 = arith.constant 0 : i32
    %c0_i32_0 = arith.constant 0 : i32
    return %arg0, %c0_i32 : i32, i32
  }
  func.func @transform_1(%arg0: i32) -> (i32, i32) {
    %c0_i32 = arith.constant 0 : i32
    %c0_i32_0 = arith.constant 0 : i32
    %c0_i32_1 = arith.constant 0 : i32
    return %c0_i32, %c0_i32_0 : i32, i32
  }
  func.func @transform_2(%arg0: i32) -> (i32, i32) {
    %c0_i32 = arith.constant 0 : i32
    %c0_i32_0 = arith.constant 0 : i32
    %c0_i32_1 = arith.constant 0 : i32
    return %c0_i32, %c0_i32_0 : i32, i32
  }
  func.func @transform_3(%arg0: i32) -> (i32, i32) {
    %c0_i32 = arith.constant 0 : i32
    %c0_i32_0 = arith.constant 0 : i32
    return %arg0, %c0_i32 : i32, i32
  }
}

</mosaic_0001>

<llo_original>
// kernel: patch_embed_apply.1
$region0: #{patch_embed_apply.1}
  #allocation0 [shape = 'u32[]', space=smem, size = 0x4, offset = 0x4, fixed_abs, tag = 'smem constant byte address 0x4 - core index']
  #allocation1 [shape = 'u32[144,128]{1,0:T(1,128)}', space=vmem, size = 0x12000, scoped, tag = 'internal scratch']
  %s0 = inlined_call_operand.vmem [shape: f32[32,64], index: 0, kind: input, shape index: {}]
  %s1 = inlined_call_operand.vmem [shape: f32[64,32], index: 1, kind: input, shape index: {}]
  %s2 = inlined_call_operand.vmem [shape: f32[1,32], index: 2, kind: input, shape index: {}]
  %s3 = inlined_call_operand.hbm [shape: f32[32,32], index: 3, kind: output, shape index: {}]
  %s4 = sld [smem:[#allocation0]]
  $region22: #{patch_embed_apply.1} parent=0
    _
  %s6 = ssub.s32 1, %s4
  %s7 = scalar_select 0, %s6, %s4
  $region1: #{patch_embed_apply.1} parent=0
    #allocation2 [shape = 'u8[16384]{0}', space=vmem, size = 0x4000, scoped, tag = 'output window, operand 0, single buffered']
    #allocation3 [shape = 's32[1]{0}', space=sflag, size = 0x4, scoped, tag = 'scoped memory for patch_embed_apply.1']
    %8 = vsyncpa [#allocation3], 0
    // Predicated region
    $region2: #{patch_embed_apply.1} parent=1 // pred_check
      _
    $region3: #{patch_embed_apply.1} parent=1 // pred_check_branch
      %10 = sbr.rel (0) target = $region5
    $region4: #{patch_embed_apply.1} parent=1 // pred_region
      _
    $region5: #{patch_embed_apply.1} parent=1 // pred_fallthru
      _
    // Predicated region
    $region6: #{patch_embed_apply.1} parent=1 // pred_check
      _
    $region7: #{patch_embed_apply.1} parent=1 // pred_check_branch
      %12 = sbr.rel (0) target = $region9
    $region8: #{patch_embed_apply.1} parent=1 // pred_region
      _
    $region9: #{patch_embed_apply.1} parent=1 // pred_fallthru
      _
    // Predicated region
    $region10: #{patch_embed_apply.1} parent=1 // pred_check
      _
    $region11: #{patch_embed_apply.1} parent=1 // pred_check_branch
      %14 = sbr.rel (0) target = $region13
    $region12: #{patch_embed_apply.1} parent=1 // pred_region
      _
    $region13: #{patch_embed_apply.1} parent=1 // pred_fallthru
      _
    %v15 = vld [vmem:[%s0] sm:$0xff]
    %v16 = vld [vmem:[%s0 + $0x8] sm:$0xff]
    %v17 = vld [vmem:[%s0 + $0x10] sm:$0xff]
    %v18 = vld [vmem:[%s0 + $0x18] sm:$0xff]
    %v19 = vld [vmem:[%s1] sm:$0xff]
    %v20 = vld [vmem:[%s1 + $0x8] sm:$0xff]
    %v21 = vld [vmem:[%s1 + $0x10] sm:$0xff]
    %v22 = vld [vmem:[%s1 + $0x18] sm:$0xff]
    %v23 = vld [vmem:[%s1 + $0x20] sm:$0xff]
    %v24 = vld [vmem:[%s1 + $0x28] sm:$0xff]
    %v25 = vld [vmem:[%s1 + $0x30] sm:$0xff]
    %v26 = vld [vmem:[%s1 + $0x38] sm:$0xff]
    %v27 = vld [vmem:[%s2] sm:$0x1]
    %v29 = vlaneseq
    %v30 = vshrl.u32 %v29, 7
    %v31 = vsub.s32 0, %v30
    %v32 = vrot.slane %v27, %v31
    %vm34 = vcmask 523264
    %v36 = vsel %vm34, %v15, 0
    %v39 = vsel %vm34, %v16, 0
    %v42 = vsel %vm34, %v17, 0
    %v45 = vsel %vm34, %v18, 0
    %47 = vmatprep.subr.mxu0 0.0
    %48 = vmatpush1.msra.mxu0 %v19
    %49 = vmatprep.subr.mxu0 0.0
    %50 = vmatpush1.msra.mxu0 %v20
    %51 = vmatprep.subr.mxu0 0.0
    %52 = vmatpush1.msra.mxu0 %v21
    %53 = vmatprep.subr.mxu0 0.0
    %54 = vmatpush1.msra.mxu0 %v22
    %55 = vmatprep.subr.mxu0 0.0
    %56 = vmatpush1.msra.mxu0 %v23
    %57 = vmatprep.subr.mxu0 0.0
    %58 = vmatpush1.msra.mxu0 %v24
    %59 = vmatprep.subr.mxu0 0.0
    %60 = vmatpush1.msra.mxu0 %v25
    %61 = vmatprep.subr.mxu0 0.0
    %62 = vmatpush1.msra.mxu0 %v26
    %63 = vmatprep.subr.mxu0 0.0
    %64 = vmatpush1.msra.mxu0 0.0
    %65 = vmatprep.subr.mxu0 0.0
    %66 = vmatpush1.msra.mxu0 0.0
    %67 = vmatprep.subr.mxu0 0.0
    %68 = vmatpush1.msra.mxu0 0.0
    %69 = vmatprep.subr.mxu0 0.0
    %70 = vmatpush1.msra.mxu0 0.0
    %71 = vmatprep.subr.mxu0 0.0
    %72 = vmatpush1.msra.mxu0 0.0
    %73 = vmatprep.subr.mxu0 0.0
    %74 = vmatpush1.msra.mxu0 0.0
    %75 = vmatprep.subr.mxu0 0.0
    %76 = vmatpush1.msra.mxu0 0.0
    %77 = vmatprep.subr.mxu0 0.0
    %78 = vmatpush1.msra.mxu0 0.0
    %79 = vmatprep.subr.mxu0 0.0
    %80 = vmatpush1.msra.mxu0 0.0
    %81 = vmatprep.subr.mxu0 0.0
    %82 = vmatpush1.msra.mxu0 0.0
    %83 = vmatprep.subr.mxu0 0.0
    %84 = vmatpush1.msra.mxu0 0.0
    %85 = vmatprep.subr.mxu0 0.0
    %86 = vmatpush1.msra.mxu0 0.0
    %87 = vmatprep.subr.mxu0 0.0
    %88 = vmatpush1.msra.mxu0 0.0
    %89 = vmatprep.subr.mxu0 0.0
    %90 = vmatpush1.msra.mxu0 0.0
    %91 = vmatprep.subr.mxu0 0.0
    %92 = vmatpush1.msra.mxu0 0.0
    %93 = vmatprep.subr.mxu0 0.0
    %94 = vmatpush1.msra.mxu0 0.0
    %95 = vmatprep.subr.mxu0 0.0
    %96 = vmatpush1.msra.mxu0 0.0
    %97 = vmatprep.subr.mxu0 0.0
    %98 = vmatpush1.msra.mxu0 0.0
    %99 = vmatprep.subr.mxu0 0.0
    %100 = vmatpush1.msra.mxu0 0.0
    %101 = vmatprep.subr.mxu0 0.0
    %102 = vmatpush1.msra.mxu0 0.0
    %103 = vmatprep.subr.mxu0 0.0
    %104 = vmatpush1.msra.mxu0 0.0
    %105 = vmatprep.subr.mxu0 0.0
    %106 = vmatpush1.msra.mxu0 0.0
    %107 = vmatprep.subr.mxu0 0.0
    %108 = vmatpush1.msra.mxu0 0.0
    %109 = vmatprep.subr.mxu0 0.0
    %110 = vmatpush1.msra.mxu0 0.0
    %111 = vmatprep.mubr.f32.mxu0 0.0
    %112 = vmatmul.mubr.f32.gmra.mrb[0].mxu0 %v36
    %v113 = vpop.f32.mrb[0].mxu0
    %v114 = vadd.f32 %v32, %v113
    %v115 = vpop.f32.mrb[0].mxu0
    %116 = vmatprep.mubr.f32.mxu0 0.0
    %117 = vmatmul.mubr.f32.gmra.mrb[0].mxu0 %v39
    %v118 = vpop.f32.mrb[0].mxu0
    %v119 = vadd.f32 %v32, %v118
    %v120 = vpop.f32.mrb[0].mxu0
    %121 = vmatprep.mubr.f32.mxu0 0.0
    %122 = vmatmul.mubr.f32.gmra.mrb[0].mxu0 %v42
    %v123 = vpop.f32.mrb[0].mxu0
    %v124 = vadd.f32 %v32, %v123
    %v125 = vpop.f32.mrb[0].mxu0
    %126 = vmatprep.mubr.f32.mxu0 0.0
    %127 = vmatmul.mubr.f32.gmra.mrb[0].mxu0 %v45
    %v128 = vpop.f32.mrb[0].mxu0
    %v129 = vadd.f32 %v32, %v128
    %v130 = vpop.f32.mrb[0].mxu0
    %131 = vdwg.mxu0
    %vm132 = vcmask 261120
    %133 = vst.msk [vmem:[#allocation2] sm:$0xff] %vm132, %v114
    %134 = vst.msk [vmem:[#allocation2 + $0x8] sm:$0xff] %vm132, %v119
    %135 = vst.msk [vmem:[#allocation2 + $0x10] sm:$0xff] %vm132, %v124
    %136 = vst.msk [vmem:[#allocation2 + $0x18] sm:$0xff] %vm132, %v129
    // Predicated region
    $region14: #{patch_embed_apply.1} parent=1 // pred_check
      _
    $region15: #{patch_embed_apply.1} parent=1 // pred_check_branch
      %138 = sbr.rel (0) target = $region17
    $region16: #{patch_embed_apply.1} parent=1 // pred_region
      %s140 = ssub.s32 512, 512
      %141 = vsyncadd [#allocation3], %s140
      %s142 = sshll.u32 [#allocation2], 4
      %s143 = int_to_ptr.vmem [resolvable:$true] %s142
      %148 = dma.vmem_to_hbm [thread:$0]  %s143, 512, %s3, [#allocation3], 128, 128, 8
    $region17: #{patch_embed_apply.1} parent=1 // pred_fallthru
      _
    // Predicated region
    $region18: #{patch_embed_apply.1} parent=1 // pred_check
      _
    $region19: #{patch_embed_apply.1} parent=1 // pred_check_branch
      %150 = sbr.rel (0) target = $region21
    $region20: #{patch_embed_apply.1} parent=1 // pred_region
      %151 = dma.done [#allocation3], 512
    $region21: #{patch_embed_apply.1} parent=1 // pred_fallthru
      _
    %152 = vsyncpa [#allocation3], 1

</llo_original>
